<compile_context>
chip_gen: v5e
topology: v5e:2x2
jax: 0.10.0
libtpu: 0.0.40
codegen_flags: <defaults>
</compile_context>

<pallas_src>
import functools

import jax
import jax.numpy as jnp
from jax import lax
from jax.experimental import pallas as pl
from jax.experimental.pallas import tpu as pltpu


_INV_SQRT2 = 0.7071067811865476  # precomputed 1/sqrt(2)
_SLACK_BYTES = 2 << 20           # headroom for Mosaic internal scratch


def _gelu_exact(x):
    # PyTorch nn.GELU() default: exact erf-based GELU (computed in f32).
    return 0.5 * x * (1.0 + lax.erf(x * _INV_SQRT2))


def _gelu_tanh(x):
    # Opt-in tanh approximation: routes the transcendental to the EUP slot.
    return jax.nn.gelu(x, approximate=True)


def _round_up(x, m):
    return (x + m - 1) // m * m


# ----------------------------------------------------------------------------
# Hardware introspection (safe fallbacks if unavailable).
# ----------------------------------------------------------------------------

def _tpu_vmem_capacity_bytes():
    try:
        return int(pltpu.get_tpu_info().vmem_capacity_bytes)
    except Exception:
        return 64 << 20  # conservative: v7x per-TensorCore VMEM


def _device_kind():
    try:
        return jax.devices()[0].device_kind.lower()
    except Exception:
        return ""


def _is_multicore_chip():
    k = _device_kind()
    return ("v7" in k) or ("7x" in k)


def _prefer_256_lanes():
    # v6e/v7x MXUs are 2x256x256; keep 128 granularity on older chips.
    k = _device_kind()
    return not any(s in k for s in ("v2", "v3", "v4", "v5"))


def _pad_dim(d, prefer256):
    p = _round_up(d, 128)
    if prefer256 and p >= 256:
        p = _round_up(p, 256)
    return p


# ----------------------------------------------------------------------------
# Kernels
# ----------------------------------------------------------------------------

def _fc_adapter_kernel_resident(x_ref, w1_ref, b1_ref, w2_ref, b2_ref, o_ref,
                                *, gelu):
    # Both weight matrices fully resident in VMEM (single-buffered).
    h = jnp.dot(x_ref[...], w1_ref[...], preferred_element_type=jnp.float32)
    h = gelu(h + b1_ref[...])
    y = jnp.dot(h.astype(w2_ref.dtype), w2_ref[...],
                preferred_element_type=jnp.float32)
    o_ref[...] = gelu(y + b2_ref[...]).astype(o_ref.dtype)


def _fc_adapter_kernel_ntiled(x_ref, w1_ref, b1_ref, w2_ref, b2_ref, o_ref,
                              h_ref, *, gelu):
    # dim3 is tiled on grid axis 1; the first layer is computed once per row
    # tile (j == 0) into VMEM scratch and reused across dim3 stripes.
    @pl.when(pl.program_id(1) == 0)
    def _():
        h = jnp.dot(x_ref[...], w1_ref[...],
                    preferred_element_type=jnp.float32)
        h_ref[...] = gelu(h + b1_ref[...]).astype(h_ref.dtype)

    y = jnp.dot(h_ref[...], w2_ref[...], preferred_element_type=jnp.float32)
    o_ref[...] = gelu(y + b2_ref[...]).astype(o_ref.dtype)


# ----------------------------------------------------------------------------
# Parameter preparation (do ONCE, reuse across calls).
# ----------------------------------------------------------------------------

def prepare_fc_adapter_params(w1, b1, w2, b2, *, use_bf16=False):
    """Pad + cast weights/biases once. Padding is exact (GELU(0) == 0)."""
    dim1, dim2 = w1.shape
    d2w, dim3 = w2.shape
    assert d2w == dim2, "weight shapes inconsistent"

    prefer256 = _prefer_256_lanes()
    d1p = _pad_dim(dim1, prefer256)
    d2p = _pad_dim(dim2, prefer256)
    d3p = _pad_dim(dim3, prefer256)
    cdt = jnp.bfloat16 if use_bf16 else jnp.float32

    w1p = jnp.zeros((d1p, d2p), cdt).at[:dim1, :dim2].set(w1.astype(cdt))
    w2p = jnp.zeros((d2p, d3p), cdt).at[:dim2, :dim3].set(w2.astype(cdt))
    b1p = jnp.zeros((1, d2p), jnp.float32).at[:, :dim2].set(
        jnp.asarray(b1, jnp.float32).reshape(1, dim2))
    b2p = jnp.zeros((1, d3p), jnp.float32).at[:, :dim3].set(
        jnp.asarray(b2, jnp.float32).reshape(1, dim3))

    return dict(w1=w1p, b1=b1p, w2=w2p, b2=b2p,
                dims=(dim1, dim2, dim3), padded_dims=(d1p, d2p, d3p),
                compute_dtype=cdt)


# ----------------------------------------------------------------------------
# VMEM accounting + tiling choice
# ----------------------------------------------------------------------------

def _est_resident(tm, d1p, d2p, d3p, wsz, osz):
    return ((d1p * d2p + d2p * d3p) * wsz      # weights, single-buffered
            + (d2p + d3p) * 4 * 2              # biases (f32)
            + tm * d1p * wsz * 2               # x tile (double-buffered)
            + tm * d3p * osz * 2               # out tile (double-buffered)
            + tm * d2p * 4                     # h intermediate (f32)
            + tm * d3p * 4)                    # y intermediate (f32)


def _est_ntiled(tm, tn, d1p, d2p, wsz, osz):
    return (d1p * d2p * wsz                    # W1 resident, single-buffered
            + d2p * tn * wsz * 2               # W2 stripe (double-buffered)
            + (d2p + tn) * 4 * 2               # biases
            + tm * d1p * wsz * 2               # x tile
            + tm * tn * osz * 2                # out tile
            + tm * d2p * wsz                   # h scratch (compute dtype)
            + tm * d2p * 4                     # h f32 before cast
            + tm * tn * 4)                     # y f32


def _choose_tiling(B, d1p, d2p, d3p, wsz, osz, row_align, budget, multicore,
                   tile_n):
    if multicore:
        # Keep >= 2 row grid steps when the batch allows it so both v7x
        # TensorCores get work under the "parallel" batch axis.
        tm = min(256, _round_up(max(pl.cdiv(B, 2), 1), row_align))
    else:
        # Single TensorCore (v5e/v6e): the grid is a sequential loop; prefer
        # one big row tile to amortize per-step overhead and MXU fill/drain.
        tm = min(512, _round_up(B, row_align))
    tm = max(tm, row_align)

    if tile_n is not None:  # manual / test override of the dim3 stripe width
        tn = max(128, _round_up(min(int(tile_n), d3p), 128))
        return tm, tn, True

    cand_tns = [t for t in (2048, 1024, 512, 256, 128) if t < d3p]

    while True:
        if _est_resident(tm, d1p, d2p, d3p, wsz, osz) + _SLACK_BYTES <= budget:
            return tm, d3p, False
        for tn in cand_tns:
            if _est_ntiled(tm, tn, d1p, d2p, wsz, osz) + _SLACK_BYTES <= budget:
                return tm, tn, True
        if tm > row_align:
            tm = max(row_align, _round_up(tm // 2, row_align))
        else:
            # TODO(synk): tile W1 over dim1/dim2 with an f32 accumulator when
            # even the first-layer weights alone exceed VMEM.
            return tm, 128, True


# ----------------------------------------------------------------------------
# Forward wrapper
# ----------------------------------------------------------------------------

def fc_adapter(x, params, *, tm=None, tile_n=None, out_dtype=None,
               approximate_gelu=False):
    """Pallas TPU forward of FC_adapter.  x: (B, dim1) -> (B, dim3)."""
    dim1, dim2, dim3 = params["dims"]
    d1p, d2p, d3p = params["padded_dims"]
    cdt = params["compute_dtype"]
    w1p, b1p, w2p, b2p = params["w1"], params["b1"], params["w2"], params["b2"]

    B, xd1 = x.shape
    assert xd1 == dim1, "x feature dim inconsistent with weights"

    out_dtype = out_dtype or x.dtype
    wsz = jnp.dtype(cdt).itemsize
    osz = jnp.dtype(out_dtype).itemsize
    row_align = 16 if cdt == jnp.bfloat16 else 8  # sublane packing

    vmem_cap = _tpu_vmem_capacity_bytes()
    budget = int(vmem_cap * 0.8)  # headroom for compiler scratch / spills
    multicore = _is_multicore_chip()

    tm_auto, tn, tiled = _choose_tiling(B, d1p, d2p, d3p, wsz, osz, row_align,
                                        budget, multicore, tile_n)
    if tm is None:
        tm = tm_auto
    else:
        tm = _round_up(max(int(tm), 1), row_align)

    # Per-call activation prep only: cast to compute dtype, pad columns to the
    # lane-dense width.  Batch stays ragged (grid = cdiv(B, tm)).
    xc = x.astype(cdt)
    if d1p != dim1:
        xc = jnp.pad(xc, ((0, 0), (0, d1p - dim1)))

    grid_rows = pl.cdiv(B, tm)
    gelu = _gelu_tanh if approximate_gelu else _gelu_exact

    cost = pl.CostEstimate(
        flops=2 * B * (d1p * d2p + d2p * d3p),
        transcendentals=B * (d2p + d3p),
        bytes_accessed=(B * d1p * wsz + (d1p * d2p + d2p * d3p) * wsz
                        + (d2p + d3p) * 4 + B * d3p * osz),
    )

    if not tiled:
        est = _est_resident(tm, d1p, d2p, d3p, wsz, osz)
        vmem_limit = int(min(max(est * 5 // 4 + _SLACK_BYTES, 16 << 20),
                             int(vmem_cap * 0.85)))
        kernel = functools.partial(_fc_adapter_kernel_resident, gelu=gelu)
        out_p = pl.pallas_call(
            kernel,
            out_shape=jax.ShapeDtypeStruct((B, d3p), out_dtype),
            grid=(grid_rows,),
            in_specs=[
                pl.BlockSpec((tm, d1p), lambda i: (i, 0)),     # x row tile
                pl.BlockSpec((d1p, d2p), lambda i: (0, 0),     # W1 resident
                             pipeline_mode=pl.Buffered(1)),
                pl.BlockSpec((1, d2p), lambda i: (0, 0),       # b1
                             pipeline_mode=pl.Buffered(1)),
                pl.BlockSpec((d2p, d3p), lambda i: (0, 0),     # W2 resident
                             pipeline_mode=pl.Buffered(1)),
                pl.BlockSpec((1, d3p), lambda i: (0, 0),       # b2
                             pipeline_mode=pl.Buffered(1)),
            ],
            out_specs=pl.BlockSpec((tm, d3p), lambda i: (i, 0)),
            compiler_params=pltpu.CompilerParams(
                dimension_semantics=("parallel",),
                vmem_limit_bytes=vmem_limit),
            cost_estimate=cost,
        )(xc, w1p, b1p, w2p, b2p)
    else:
        grid_n = pl.cdiv(d3p, tn)
        est = _est_ntiled(tm, tn, d1p, d2p, wsz, osz)
        vmem_limit = int(min(max(est * 5 // 4 + _SLACK_BYTES, 16 << 20),
                             int(vmem_cap * 0.85)))
        kernel = functools.partial(_fc_adapter_kernel_ntiled, gelu=gelu)
        out_p = pl.pallas_call(
            kernel,
            out_shape=jax.ShapeDtypeStruct((B, d3p), out_dtype),
            grid=(grid_rows, grid_n),
            in_specs=[
                pl.BlockSpec((tm, d1p), lambda i, j: (i, 0)),   # x row tile
                pl.BlockSpec((d1p, d2p), lambda i, j: (0, 0),   # W1 resident
                             pipeline_mode=pl.Buffered(1)),
                pl.BlockSpec((1, d2p), lambda i, j: (0, 0),     # b1
                             pipeline_mode=pl.Buffered(1)),
                pl.BlockSpec((d2p, tn), lambda i, j: (0, j)),   # W2 stripe
                pl.BlockSpec((1, tn), lambda i, j: (0, j)),     # b2 stripe
            ],
            out_specs=pl.BlockSpec((tm, tn), lambda i, j: (i, j)),
            scratch_shapes=[pltpu.VMEM((tm, d2p), cdt)],        # h scratch
            compiler_params=pltpu.CompilerParams(
                dimension_semantics=("parallel", "arbitrary"),
                vmem_limit_bytes=vmem_limit),
            cost_estimate=cost,
        )(xc, w1p, b1p, w2p, b2p)

    return out_p[:, :dim3] if d3p != dim3 else out_p


# ----------------------------------------------------------------------------
# Reference + demo
# ----------------------------------------------------------------------------

def init_params(key, dim1, dim2, dim3, dtype=jnp.float32):
    # Mimic PyTorch Linear default init: uniform(+/- 1/sqrt(fan_in)).
    k1, k2, k3, k4 = jax.random.split(key, 4)
    lim1 = 1.0 / float(jnp.sqrt(dim1))
    lim2 = 1.0 / float(jnp.sqrt(dim2))
    w1 = jax.random.uniform(k1, (dim1, dim2), dtype, -lim1, lim1)
    b1 = jax.random.uniform(k2, (dim2,), dtype, -lim1, lim1)
    w2 = jax.random.uniform(k3, (dim2, dim3), dtype, -lim2, lim2)
    b2 = jax.random.uniform(k4, (dim3,), dtype, -lim2, lim2)
    return w1, b1, w2, b2


def fc_adapter_ref(x, w1, b1, w2, b2):
    h = _gelu_exact(x @ w1 + b1.reshape(1, -1))
    return _gelu_exact(h @ w2 + b2.reshape(1, -1))


if __name__ == "__main__":
    # Small shapes consistent with the module: x is (batch, dim1).
    B, dim1, dim2, dim3 = 16, 32, 64, 48
    key = jax.random.PRNGKey(0)
    kx, kp = jax.random.split(key)
    x = jax.random.normal(kx, (B, dim1), jnp.float32)
    w1, b1, w2, b2 = init_params(kp, dim1, dim2, dim3)
    ref = fc_adapter_ref(x, w1, b1, w2, b2)

    # f32 compute path, weights fully resident (params prepared once, reused).
    params_f32 = prepare_fc_adapter_params(w1, b1, w2, b2)
    out_f32 = jax.block_until_ready(fc_adapter(x, params_f32))
    assert out_f32.shape == (B, dim3)
    assert jnp.allclose(out_f32, ref, atol=1e-5, rtol=1e-5), "f32 mismatch"

    # bf16 MXU-input path (f32 accumulation): looser tolerance expected.
    params_bf16 = prepare_fc_adapter_params(w1, b1, w2, b2, use_bf16=True)
    out_bf16 = jax.block_until_ready(fc_adapter(x, params_bf16))
    assert out_bf16.shape == (B, dim3)
    assert jnp.allclose(out_bf16, ref, atol=3e-2, rtol=3e-2), "bf16 mismatch"

    # dim3-tiled path (W2 streamed in 128-wide stripes), exercised at small
    # shapes by forcing tile_n so the large-weight code path is covered.
    dim3b = 160
    w1b, b1b, w2b, b2b = init_params(jax.random.PRNGKey(1), dim1, dim2, dim3b)
    refb = fc_adapter_ref(x, w1b, b1b, w2b, b2b)
    params_b = prepare_fc_adapter_params(w1b, b1b, w2b, b2b)
    out_b = jax.block_until_ready(fc_adapter(x, params_b, tile_n=128))
    assert out_b.shape == (B, dim3b)
    assert jnp.allclose(out_b, refb, atol=1e-5, rtol=1e-5), "tiled-dim3 mismatch"

    print("KERNEL_OK")
</pallas_src>

<mosaic_0001>
module attributes {stable_mosaic.version = 11 : i64} {
  func.func @_fc_adapter_kernel_resident(%arg0: i32, %arg1: memref<16x128xf32, #tpu.memory_space<vmem>>, %arg2: memref<128x128xf32, #tpu.memory_space<vmem>>, %arg3: memref<1x128xf32, #tpu.memory_space<vmem>>, %arg4: memref<128x128xf32, #tpu.memory_space<vmem>>, %arg5: memref<1x128xf32, #tpu.memory_space<vmem>>, %arg6: memref<16x128xf32, #tpu.memory_space<vmem>>) attributes {dimension_semantics = [#tpu.dimension_semantics<parallel>], iteration_bounds = array<i64: 1>, scalar_prefetch = 0 : i64, scratch_operands = 0 : i64, tpu.core_type = #tpu.core_type<tc>, window_params = [{transform_indices = @transform_0, window_bounds = array<i64: 16, 128>}, {pipeline_mode = #tpu.pipeline_mode<synchronous>, transform_indices = @transform_1, window_bounds = array<i64: 128, 128>}, {pipeline_mode = #tpu.pipeline_mode<synchronous>, transform_indices = @transform_2, window_bounds = array<i64: 1, 128>}, {pipeline_mode = #tpu.pipeline_mode<synchronous>, transform_indices = @transform_3, window_bounds = array<i64: 128, 128>}, {pipeline_mode = #tpu.pipeline_mode<synchronous>, transform_indices = @transform_4, window_bounds = array<i64: 1, 128>}, {transform_indices = @transform_5, window_bounds = array<i64: 16, 128>}]} {
    %c0 = arith.constant 0 : index
    %c0_0 = arith.constant 0 : index
    %0 = vector.load %arg1[%c0, %c0_0] : memref<16x128xf32, #tpu.memory_space<vmem>>, vector<16x128xf32>
    %c0_1 = arith.constant 0 : index
    %c0_2 = arith.constant 0 : index
    %1 = vector.load %arg2[%c0_1, %c0_2] : memref<128x128xf32, #tpu.memory_space<vmem>>, vector<128x128xf32>
    %cst = arith.constant dense<0.000000e+00> : vector<16x128xf32>
    %2 = tpu.matmul %0, %1, %cst {dimension_numbers = #tpu.dot_dimension_numbers<[1], [0], [0], [1], [0, 0, 1, 1], [], []>} : vector<16x128xf32>, vector<128x128xf32>, vector<16x128xf32> -> vector<16x128xf32>
    %c0_3 = arith.constant 0 : index
    %c0_4 = arith.constant 0 : index
    %3 = vector.load %arg3[%c0_3, %c0_4] : memref<1x128xf32, #tpu.memory_space<vmem>>, vector<1x128xf32>
    %4 = vector.broadcast %3 : vector<1x128xf32> to vector<16x128xf32>
    %5 = arith.addf %2, %4 : vector<16x128xf32>
    %cst_5 = arith.constant 5.000000e-01 : f32
    %6 = vector.broadcast %cst_5 : f32 to vector<16x128xf32>
    %7 = arith.mulf %6, %5 : vector<16x128xf32>
    %cst_6 = arith.constant 0.707106769 : f32
    %8 = vector.broadcast %cst_6 : f32 to vector<16x128xf32>
    %9 = arith.mulf %5, %8 : vector<16x128xf32>
    %10 = math.erf %9 : vector<16x128xf32>
    %cst_7 = arith.constant 1.000000e+00 : f32
    %11 = vector.broadcast %cst_7 : f32 to vector<16x128xf32>
    %12 = arith.addf %11, %10 : vector<16x128xf32>
    %13 = arith.mulf %7, %12 : vector<16x128xf32>
    %c0_8 = arith.constant 0 : index
    %c0_9 = arith.constant 0 : index
    %14 = vector.load %arg4[%c0_8, %c0_9] : memref<128x128xf32, #tpu.memory_space<vmem>>, vector<128x128xf32>
    %cst_10 = arith.constant dense<0.000000e+00> : vector<16x128xf32>
    %15 = tpu.matmul %13, %14, %cst_10 {dimension_numbers = #tpu.dot_dimension_numbers<[1], [0], [0], [1], [0, 0, 1, 1], [], []>} : vector<16x128xf32>, vector<128x128xf32>, vector<16x128xf32> -> vector<16x128xf32>
    %c0_11 = arith.constant 0 : index
    %c0_12 = arith.constant 0 : index
    %16 = vector.load %arg5[%c0_11, %c0_12] : memref<1x128xf32, #tpu.memory_space<vmem>>, vector<1x128xf32>
    %17 = vector.broadcast %16 : vector<1x128xf32> to vector<16x128xf32>
    %18 = arith.addf %15, %17 : vector<16x128xf32>
    %cst_13 = arith.constant 5.000000e-01 : f32
    %19 = vector.broadcast %cst_13 : f32 to vector<16x128xf32>
    %20 = arith.mulf %19, %18 : vector<16x128xf32>
    %cst_14 = arith.constant 0.707106769 : f32
    %21 = vector.broadcast %cst_14 : f32 to vector<16x128xf32>
    %22 = arith.mulf %18, %21 : vector<16x128xf32>
    %23 = math.erf %22 : vector<16x128xf32>
    %cst_15 = arith.constant 1.000000e+00 : f32
    %24 = vector.broadcast %cst_15 : f32 to vector<16x128xf32>
    %25 = arith.addf %24, %23 : vector<16x128xf32>
    %26 = arith.mulf %20, %25 : vector<16x128xf32>
    %c0_16 = arith.constant 0 : index
    %c0_17 = arith.constant 0 : index
    %27 = vector.load %arg6[%c0_16, %c0_17] : memref<16x128xf32, #tpu.memory_space<vmem>>, vector<16x128xf32>
    tpu.vector_store %arg6[%c0_16, %c0_17], %26 {strides = array<i32>} : memref<16x128xf32, #tpu.memory_space<vmem>>, vector<16x128xf32>,
    return
  }
  func.func @transform_0(%arg0: i32) -> (i32, i32) {
    %c0_i32 = arith.constant 0 : i32
    %c0_i32_0 = arith.constant 0 : i32
    return %arg0, %c0_i32 : i32, i32
  }
  func.func @transform_1(%arg0: i32) -> (i32, i32) {
    %c0_i32 = arith.constant 0 : i32
    %c0_i32_0 = arith.constant 0 : i32
    %c0_i32_1 = arith.constant 0 : i32
    return %c0_i32, %c0_i32_0 : i32, i32
  }
  func.func @transform_2(%arg0: i32) -> (i32, i32) {
    %c0_i32 = arith.constant 0 : i32
    %c0_i32_0 = arith.constant 0 : i32
    %c0_i32_1 = arith.constant 0 : i32
    return %c0_i32, %c0_i32_0 : i32, i32
  }
  func.func @transform_3(%arg0: i32) -> (i32, i32) {
    %c0_i32 = arith.constant 0 : i32
    %c0_i32_0 = arith.constant 0 : i32
    %c0_i32_1 = arith.constant 0 : i32
    return %c0_i32, %c0_i32_0 : i32, i32
  }
  func.func @transform_4(%arg0: i32) -> (i32, i32) {
    %c0_i32 = arith.constant 0 : i32
    %c0_i32_0 = arith.constant 0 : i32
    %c0_i32_1 = arith.constant 0 : i32
    return %c0_i32, %c0_i32_0 : i32, i32
  }
  func.func @transform_5(%arg0: i32) -> (i32, i32) {
    %c0_i32 = arith.constant 0 : i32
    %c0_i32_0 = arith.constant 0 : i32
    return %arg0, %c0_i32 : i32, i32
  }
}

</mosaic_0001>

<llo_original>
// kernel: tpu_custom_call.1
$region0: #{tpu_custom_call.1}
  #allocation0 [shape = 'u32[]', space=smem, size = 0x4, offset = 0x4, fixed_abs, tag = 'smem constant byte address 0x4 - core index']
  #allocation1 [shape = 'u32[72,128]{1,0:T(1,128)}', space=vmem, size = 0x9000, scoped, tag = 'internal scratch']
  %s0 = inlined_call_operand.hbm [shape: f32[16,128], index: 0, kind: input, shape index: {}]
  %s1 = inlined_call_operand.hbm [shape: f32[128,128], index: 1, kind: input, shape index: {}]
  %s2 = inlined_call_operand.vmem [shape: f32[1,128], index: 2, kind: input, shape index: {}]
  %s3 = inlined_call_operand.hbm [shape: f32[128,128], index: 3, kind: input, shape index: {}]
  %s4 = inlined_call_operand.vmem [shape: f32[1,128], index: 4, kind: input, shape index: {}]
  %s5 = inlined_call_operand.hbm [shape: f32[16,128], index: 5, kind: output, shape index: {}]
  %s6 = sld [smem:[#allocation0]]
  $region42: #{tpu_custom_call.1} parent=0
    _
  %s8 = ssub.s32 1, %s6
  %s9 = scalar_select 0, %s8, %s6
  $region1: #{tpu_custom_call.1} parent=0
    #allocation2 [shape = 'u8[8192]{0}', space=vmem, size = 0x2000, scoped, tag = 'input window, operand 0, single buffered']
    #allocation3 [shape = 's32[1]{0}', space=sflag, size = 0x4, scoped, tag = 'scoped memory for tpu_custom_call.1']
    #allocation4 [shape = 's32[1]{0}', space=sflag, size = 0x4, scoped, tag = 'scoped memory for tpu_custom_call.1']
    #allocation5 [shape = 'u8[65536]{0}', space=vmem, size = 0x10000, scoped, tag = 'input window, operand 1, single buffered']
    #allocation6 [shape = 's32[1]{0}', space=sflag, size = 0x4, scoped, tag = 'scoped memory for tpu_custom_call.1']
    #allocation7 [shape = 'u8[65536]{0}', space=vmem, size = 0x10000, scoped, tag = 'input window, operand 3, single buffered']
    #allocation8 [shape = 'u8[8192]{0}', space=vmem, size = 0x2000, scoped, tag = 'output window, operand 0, single buffered']
    %10 = vsyncpa [#allocation3], 0
    %11 = vsyncpa [#allocation6], 0
    %12 = vsyncpa [#allocation4], 0
    // Predicated region
    $region2: #{tpu_custom_call.1} parent=1 // pred_check
      _
    $region3: #{tpu_custom_call.1} parent=1 // pred_check_branch
      %14 = sbr.rel (0) target = $region5
    $region4: #{tpu_custom_call.1} parent=1 // pred_region
      %16 = vsyncadd [#allocation3], 0
      %s17 = sshll.u32 %s0, 4
      %s18 = int_to_ptr.hbm [resolvable:$true] %s17
      %s19 = sshll.u32 [#allocation2], 4
      %s20 = int_to_ptr.vmem [resolvable:$true] %s19
      %25 = dma.hbm_to_vmem [thread:$0]  %s18, 256, %s20, [#allocation3], 128, 128, 8
    $region5: #{tpu_custom_call.1} parent=1 // pred_fallthru
      _
    // Predicated region
    $region6: #{tpu_custom_call.1} parent=1 // pred_check
      _
    $region7: #{tpu_custom_call.1} parent=1 // pred_check_branch
      %27 = sbr.rel (0) target = $region9
    $region8: #{tpu_custom_call.1} parent=1 // pred_region
      %29 = vsyncadd [#allocation6], 0
      %s30 = sshll.u32 %s1, 4
      %s31 = int_to_ptr.hbm [resolvable:$true] %s30
      %s32 = sshll.u32 [#allocation5], 4
      %s33 = int_to_ptr.vmem [resolvable:$true] %s32
      %38 = dma.hbm_to_vmem [thread:$0]  %s31, 2048, %s33, [#allocation6], 128, 128, 8
    $region9: #{tpu_custom_call.1} parent=1 // pred_fallthru
      _
    // Predicated region
    $region10: #{tpu_custom_call.1} parent=1 // pred_check
      _
    $region11: #{tpu_custom_call.1} parent=1 // pred_check_branch
      %40 = sbr.rel (0) target = $region13
    $region12: #{tpu_custom_call.1} parent=1 // pred_region
      _
    $region13: #{tpu_custom_call.1} parent=1 // pred_fallthru
      _
    // Predicated region
    $region14: #{tpu_custom_call.1} parent=1 // pred_check
      _
    $region15: #{tpu_custom_call.1} parent=1 // pred_check_branch
      %42 = sbr.rel (0) target = $region17
    $region16: #{tpu_custom_call.1} parent=1 // pred_region
      %44 = vsyncadd [#allocation6], 0
      %s45 = sshll.u32 %s3, 4
      %s46 = int_to_ptr.hbm [resolvable:$true] %s45
      %s47 = sshll.u32 [#allocation7], 4
      %s48 = int_to_ptr.vmem [resolvable:$true] %s47
      %53 = dma.hbm_to_vmem [thread:$0]  %s46, 2048, %s48, [#allocation6], 128, 128, 8
    $region17: #{tpu_custom_call.1} parent=1 // pred_fallthru
      _
    // Predicated region
    $region18: #{tpu_custom_call.1} parent=1 // pred_check
      _
    $region19: #{tpu_custom_call.1} parent=1 // pred_check_branch
      %55 = sbr.rel (0) target = $region21
    $region20: #{tpu_custom_call.1} parent=1 // pred_region
      _
    $region21: #{tpu_custom_call.1} parent=1 // pred_fallthru
      _
    // Predicated region
    $region22: #{tpu_custom_call.1} parent=1 // pred_check
      _
    $region23: #{tpu_custom_call.1} parent=1 // pred_check_branch
      %57 = sbr.rel (0) target = $region25
    $region24: #{tpu_custom_call.1} parent=1 // pred_region
      %59 = dma.done [#allocation3], 256
    $region25: #{tpu_custom_call.1} parent=1 // pred_fallthru
      _
    // Predicated region
    $region26: #{tpu_custom_call.1} parent=1 // pred_check
      _
    $region27: #{tpu_custom_call.1} parent=1 // pred_check_branch
      %61 = sbr.rel (0) target = $region29
    $region28: #{tpu_custom_call.1} parent=1 // pred_region
      %63 = dma.done [#allocation6], 2048
    $region29: #{tpu_custom_call.1} parent=1 // pred_fallthru
      _
    // Predicated region
    $region30: #{tpu_custom_call.1} parent=1 // pred_check
      _
    $region31: #{tpu_custom_call.1} parent=1 // pred_check_branch
      %65 = sbr.rel (0) target = $region33
    $region32: #{tpu_custom_call.1} parent=1 // pred_region
      %67 = dma.done [#allocation6], 2048
    $region33: #{tpu_custom_call.1} parent=1 // pred_fallthru
      _
    %v68 = vld [vmem:[#allocation2] sm:$0xff]
    %v69 = vld [vmem:[#allocation2 + $0x8] sm:$0xff]
    %v70 = vld [vmem:[#allocation5] sm:$0xff]
    %v71 = vld [vmem:[#allocation5 + $0x8] sm:$0xff]
    %v72 = vld [vmem:[#allocation5 + $0x10] sm:$0xff]
    %v73 = vld [vmem:[#allocation5 + $0x18] sm:$0xff]
    %v74 = vld [vmem:[#allocation5 + $0x20] sm:$0xff]
    %v75 = vld [vmem:[#allocation5 + $0x28] sm:$0xff]
    %v76 = vld [vmem:[#allocation5 + $0x30] sm:$0xff]
    %v77 = vld [vmem:[#allocation5 + $0x38] sm:$0xff]
    %v78 = vld [vmem:[#allocation5 + $0x40] sm:$0xff]
    %v79 = vld [vmem:[#allocation5 + $0x48] sm:$0xff]
    %v80 = vld [vmem:[#allocation5 + $0x50] sm:$0xff]
    %v81 = vld [vmem:[#allocation5 + $0x58] sm:$0xff]
    %v82 = vld [vmem:[#allocation5 + $0x60] sm:$0xff]
    %v83 = vld [vmem:[#allocation5 + $0x68] sm:$0xff]
    %v84 = vld [vmem:[#allocation5 + $0x70] sm:$0xff]
    %v85 = vld [vmem:[#allocation5 + $0x78] sm:$0xff]
    %v86 = vld [vmem:[%s2] sm:$0x1]
    %v88 = vperm.slane %v86, 0
    %90 = vmatpush.msra.mxu0 %v85
    %91 = vmatpush.msra.mxu0 %v84
    %92 = vmatpush.msra.mxu0 %v83
    %93 = vmatpush.msra.mxu0 %v82
    %94 = vmatpush.msra.mxu0 %v81
    %95 = vmatpush.msra.mxu0 %v80
    %96 = vmatpush.msra.mxu0 %v79
    %97 = vmatpush.msra.mxu0 %v78
    %98 = vmatpush.msra.mxu0 %v77
    %99 = vmatpush.msra.mxu0 %v76
    %100 = vmatpush.msra.mxu0 %v75
    %101 = vmatpush.msra.mxu0 %v74
    %102 = vmatpush.msra.mxu0 %v73
    %103 = vmatpush.msra.mxu0 %v72
    %104 = vmatpush.msra.mxu0 %v71
    %105 = vmatpush.msra.mxu0 %v70
    %106 = vmatmul.f32.gmra.mxu0 %v68
    %v107 = vpop.f32.mrf.mxu0
    %v108 = vadd.f32 %v88, %v107
    %109 = vmatmul.f32.gmra.mxu0 %v69
    %v110 = vpop.f32.mrf.mxu0
    %v111 = vadd.f32 %v88, %v110
    %112 = vdwg.mxu0
    %v113 = vmul.f32 %v108, 0.5
    %v114 = vmul.f32 %v111, 0.5
    %v115 = vmul.f32 %v108, 0.70710677
    %v116 = vmul.f32 %v111, 0.70710677
    %v117 = vmul.f32 %v115, %v115
    %v118 = vmin.f32 16.0, %v117
    %v119 = vmul.f32 %v118, 2.1237322e-06
    %v120 = vadd.f32 %v119, 0.00028619796
    %v121 = vmul.f32 %v118, %v120
    %v122 = vadd.f32 %v121, 0.0036580483
    %v123 = vmul.f32 %v118, %v122
    %v124 = vadd.f32 %v123, 0.05243302
    %v125 = vmul.f32 %v118, %v124
    %v126 = vadd.f32 %v125, 0.18741608
    %v127 = vmul.f32 %v118, %v126
    %v128 = vadd.f32 %v127, 1.1283791
    %v129 = vmul.f32 %v115, %v128
    %v130 = vmul.f32 %v118, 3.8918573e-05
    %v131 = vadd.f32 %v130, 0.001143296
    %v132 = vmul.f32 %v118, %v131
    %v133 = vadd.f32 %v132, 0.014752088
    %v134 = vmul.f32 %v118, %v133
    %v135 = vadd.f32 %v134, 0.112945676
    %v136 = vmul.f32 %v118, %v135
    %v137 = vadd.f32 %v136, 0.4994258
    %v138 = vmul.f32 %v118, %v137
    %v139 = vadd.f32 %v138, 1.0
    %v140 = vrcp.pop %v139
    %v141 = vmul.f32 %v139, %v140
    %v142 = vsub.f32 1.0, %v141
    %v143 = vmul.f32 %v140, %v142
    %v144 = vadd.f32 %v140, %v143
    %vm145 = vweird.f32 %v139
    %vm146 = vweird.f32 %v140
    %vm147 = vmor %vm145, %vm146
    %v148 = vsel %vm147, %v140, %v144
    %v149 = vand.u32 2147483647, %v139
    %vm150 = vcmp.eq.f32.partialorder %v149, 8.507059e+37
    %v151 = vand.u32 %v139, 2147483648
    %v152 = vor.u32 1.1754944e-38, %v151
    %v153 = vsel %vm150, %v152, %v148
    %v154 = vmul.f32 %v129, %v153
    %v155 = vmin.f32 %v154, 1.0
    %v156 = vmax.f32 %v155, -1.0
    %v157 = vmul.f32 %v116, %v116
    %v158 = vmin.f32 16.0, %v157
    %v159 = vmul.f32 %v158, 2.1237322e-06
    %v160 = vadd.f32 %v159, 0.00028619796
    %v161 = vmul.f32 %v158, %v160
    %v162 = vadd.f32 %v161, 0.0036580483
    %v163 = vmul.f32 %v158, %v162
    %v164 = vadd.f32 %v163, 0.05243302
    %v165 = vmul.f32 %v158, %v164
    %v166 = vadd.f32 %v165, 0.18741608
    %v167 = vmul.f32 %v158, %v166
    %v168 = vadd.f32 %v167, 1.1283791
    %v169 = vmul.f32 %v116, %v168
    %v170 = vmul.f32 %v158, 3.8918573e-05
    %v171 = vadd.f32 %v170, 0.001143296
    %v172 = vmul.f32 %v158, %v171
    %v173 = vadd.f32 %v172, 0.014752088
    %v174 = vmul.f32 %v158, %v173
    %v175 = vadd.f32 %v174, 0.112945676
    %v176 = vmul.f32 %v158, %v175
    %v177 = vadd.f32 %v176, 0.4994258
    %v178 = vmul.f32 %v158, %v177
    %v179 = vadd.f32 %v178, 1.0
    %v180 = vrcp.pop %v179
    %v181 = vmul.f32 %v179, %v180
    %v182 = vsub.f32 1.0, %v181
    %v183 = vmul.f32 %v180, %v182
    %v184 = vadd.f32 %v180, %v183
    %vm185 = vweird.f32 %v179
    %vm186 = vweird.f32 %v180
    %vm187 = vmor %vm185, %vm186
    %v188 = vsel %vm187, %v180, %v184
    %v189 = vand.u32 2147483647, %v179
    %vm190 = vcmp.eq.f32.partialorder %v189, 8.507059e+37
    %v191 = vand.u32 %v179, 2147483648
    %v192 = vor.u32 1.1754944e-38, %v191
    %v193 = vsel %vm190, %v192, %v188
    %v194 = vmul.f32 %v169, %v193
    %v195 = vmin.f32 %v194, 1.0
    %v196 = vmax.f32 %v195, -1.0
    %v197 = vadd.f32 %v156, 1.0
    %v198 = vadd.f32 %v196, 1.0
    %v199 = vmul.f32 %v113, %v197
    %v200 = vmul.f32 %v114, %v198
    %v201 = vld [vmem:[#allocation7] sm:$0xff]
    %v202 = vld [vmem:[#allocation7 + $0x8] sm:$0xff]
    %v203 = vld [vmem:[#allocation7 + $0x10] sm:$0xff]
    %v204 = vld [vmem:[#allocation7 + $0x18] sm:$0xff]
    %v205 = vld [vmem:[#allocation7 + $0x20] sm:$0xff]
    %v206 = vld [vmem:[#allocation7 + $0x28] sm:$0xff]
    %v207 = vld [vmem:[#allocation7 + $0x30] sm:$0xff]
    %v208 = vld [vmem:[#allocation7 + $0x38] sm:$0xff]
    %v209 = vld [vmem:[#allocation7 + $0x40] sm:$0xff]
    %v210 = vld [vmem:[#allocation7 + $0x48] sm:$0xff]
    %v211 = vld [vmem:[#allocation7 + $0x50] sm:$0xff]
    %v212 = vld [vmem:[#allocation7 + $0x58] sm:$0xff]
    %v213 = vld [vmem:[#allocation7 + $0x60] sm:$0xff]
    %v214 = vld [vmem:[#allocation7 + $0x68] sm:$0xff]
    %v215 = vld [vmem:[#allocation7 + $0x70] sm:$0xff]
    %v216 = vld [vmem:[#allocation7 + $0x78] sm:$0xff]
    %v217 = vld [vmem:[%s4] sm:$0x1]
    %v219 = vperm.slane %v217, 0
    %221 = vmatpush.msra.mxu0 %v216
    %222 = vmatpush.msra.mxu0 %v215
    %223 = vmatpush.msra.mxu0 %v214
    %224 = vmatpush.msra.mxu0 %v213
    %225 = vmatpush.msra.mxu0 %v212
    %226 = vmatpush.msra.mxu0 %v211
    %227 = vmatpush.msra.mxu0 %v210
    %228 = vmatpush.msra.mxu0 %v209
    %229 = vmatpush.msra.mxu0 %v208
    %230 = vmatpush.msra.mxu0 %v207
    %231 = vmatpush.msra.mxu0 %v206
    %232 = vmatpush.msra.mxu0 %v205
    %233 = vmatpush.msra.mxu0 %v204
    %234 = vmatpush.msra.mxu0 %v203
    %235 = vmatpush.msra.mxu0 %v202
    %236 = vmatpush.msra.mxu0 %v201
    %237 = vmatmul.f32.gmra.mxu0 %v199
    %v238 = vpop.f32.mrf.mxu0
    %v239 = vadd.f32 %v219, %v238
    %240 = vmatmul.f32.gmra.mxu0 %v200
    %v241 = vpop.f32.mrf.mxu0
    %v242 = vadd.f32 %v219, %v241
    %243 = vdwg.mxu0
    %v244 = vmul.f32 %v239, 0.5
    %v245 = vmul.f32 %v242, 0.5
    %v246 = vmul.f32 %v239, 0.70710677
    %v247 = vmul.f32 %v242, 0.70710677
    %v248 = vmul.f32 %v246, %v246
    %v249 = vmin.f32 16.0, %v248
    %v250 = vmul.f32 %v249, 2.1237322e-06
    %v251 = vadd.f32 %v250, 0.00028619796
    %v252 = vmul.f32 %v249, %v251
    %v253 = vadd.f32 %v252, 0.0036580483
    %v254 = vmul.f32 %v249, %v253
    %v255 = vadd.f32 %v254, 0.05243302
    %v256 = vmul.f32 %v249, %v255
    %v257 = vadd.f32 %v256, 0.18741608
    %v258 = vmul.f32 %v249, %v257
    %v259 = vadd.f32 %v258, 1.1283791
    %v260 = vmul.f32 %v246, %v259
    %v261 = vmul.f32 %v249, 3.8918573e-05
    %v262 = vadd.f32 %v261, 0.001143296
    %v263 = vmul.f32 %v249, %v262
    %v264 = vadd.f32 %v263, 0.014752088
    %v265 = vmul.f32 %v249, %v264
    %v266 = vadd.f32 %v265, 0.112945676
    %v267 = vmul.f32 %v249, %v266
    %v268 = vadd.f32 %v267, 0.4994258
    %v269 = vmul.f32 %v249, %v268
    %v270 = vadd.f32 %v269, 1.0
    %v271 = vrcp.pop %v270
    %v272 = vmul.f32 %v270, %v271
    %v273 = vsub.f32 1.0, %v272
    %v274 = vmul.f32 %v271, %v273
    %v275 = vadd.f32 %v271, %v274
    %vm276 = vweird.f32 %v270
    %vm277 = vweird.f32 %v271
    %vm278 = vmor %vm276, %vm277
    %v279 = vsel %vm278, %v271, %v275
    %v280 = vand.u32 2147483647, %v270
    %vm281 = vcmp.eq.f32.partialorder %v280, 8.507059e+37
    %v282 = vand.u32 %v270, 2147483648
    %v283 = vor.u32 1.1754944e-38, %v282
    %v284 = vsel %vm281, %v283, %v279
    %v285 = vmul.f32 %v260, %v284
    %v286 = vmin.f32 %v285, 1.0
    %v287 = vmax.f32 %v286, -1.0
    %v288 = vmul.f32 %v247, %v247
    %v289 = vmin.f32 16.0, %v288
    %v290 = vmul.f32 %v289, 2.1237322e-06
    %v291 = vadd.f32 %v290, 0.00028619796
    %v292 = vmul.f32 %v289, %v291
    %v293 = vadd.f32 %v292, 0.0036580483
    %v294 = vmul.f32 %v289, %v293
    %v295 = vadd.f32 %v294, 0.05243302
    %v296 = vmul.f32 %v289, %v295
    %v297 = vadd.f32 %v296, 0.18741608
    %v298 = vmul.f32 %v289, %v297
    %v299 = vadd.f32 %v298, 1.1283791
    %v300 = vmul.f32 %v247, %v299
    %v301 = vmul.f32 %v289, 3.8918573e-05
    %v302 = vadd.f32 %v301, 0.001143296
    %v303 = vmul.f32 %v289, %v302
    %v304 = vadd.f32 %v303, 0.014752088
    %v305 = vmul.f32 %v289, %v304
    %v306 = vadd.f32 %v305, 0.112945676
    %v307 = vmul.f32 %v289, %v306
    %v308 = vadd.f32 %v307, 0.4994258
    %v309 = vmul.f32 %v289, %v308
    %v310 = vadd.f32 %v309, 1.0
    %v311 = vrcp.pop %v310
    %v312 = vmul.f32 %v310, %v311
    %v313 = vsub.f32 1.0, %v312
    %v314 = vmul.f32 %v311, %v313
    %v315 = vadd.f32 %v311, %v314
    %vm316 = vweird.f32 %v310
    %vm317 = vweird.f32 %v311
    %vm318 = vmor %vm316, %vm317
    %v319 = vsel %vm318, %v311, %v315
    %v320 = vand.u32 2147483647, %v310
    %vm321 = vcmp.eq.f32.partialorder %v320, 8.507059e+37
    %v322 = vand.u32 %v310, 2147483648
    %v323 = vor.u32 1.1754944e-38, %v322
    %v324 = vsel %vm321, %v323, %v319
    %v325 = vmul.f32 %v300, %v324
    %v326 = vmin.f32 %v325, 1.0
    %v327 = vmax.f32 %v326, -1.0
    %v328 = vadd.f32 %v287, 1.0
    %v329 = vadd.f32 %v327, 1.0
    %v330 = vmul.f32 %v244, %v328
    %v331 = vmul.f32 %v245, %v329
    %332 = vst [vmem:[#allocation8] sm:$0xff] %v330
    %333 = vst [vmem:[#allocation8 + $0x8] sm:$0xff] %v331
    // Predicated region
    $region34: #{tpu_custom_call.1} parent=1 // pred_check
      _
    $region35: #{tpu_custom_call.1} parent=1 // pred_check_branch
      %335 = sbr.rel (0) target = $region37
    $region36: #{tpu_custom_call.1} parent=1 // pred_region
      %337 = vsyncadd [#allocation4], 0
      %s338 = sshll.u32 [#allocation8], 4
      %s339 = int_to_ptr.vmem [resolvable:$true] %s338
      %s340 = sshll.u32 %s5, 4
      %s341 = int_to_ptr.hbm [resolvable:$true] %s340
      %346 = dma.vmem_to_hbm [thread:$0]  %s339, 256, %s341, [#allocation4], 128, 128, 8
    $region37: #{tpu_custom_call.1} parent=1 // pred_fallthru
      _
    // Predicated region
    $region38: #{tpu_custom_call.1} parent=1 // pred_check
      _
    $region39: #{tpu_custom_call.1} parent=1 // pred_check_branch
      %348 = sbr.rel (0) target = $region41
    $region40: #{tpu_custom_call.1} parent=1 // pred_region
      %350 = dma.done [#allocation4], 256
    $region41: #{tpu_custom_call.1} parent=1 // pred_fallthru
      _
    %351 = vsyncpa [#allocation3], 1
    %352 = vsyncpa [#allocation6], 1
    %353 = vsyncpa [#allocation4], 1

</llo_original>
